<compile_context>
chip_gen: v7x
topology: tpu7x:2x2x1
jax: 0.10.0
libtpu: 0.0.40
codegen_flags: <defaults>
</compile_context>

<pallas_src>
import math
import dataclasses

import jax
import jax.numpy as jnp
from jax.experimental import pallas as pl
from jax.experimental.pallas import tpu as pltpu


# ----------------------------------------------------------------------------- math
def _gelu_tanh(x):
    # nn.GELU(approximate='tanh'): 0.5*x*(1 + tanh(sqrt(2/pi)*(x + 0.044715*x^3)))
    c = math.sqrt(2.0 / math.pi)
    return 0.5 * x * (1.0 + jnp.tanh(c * (x + 0.044715 * x * x * x)))


def _round_up(n, m):
    return ((n + m - 1) // m) * m


# ----------------------------------------------------------------------------- kernel
def _mlp_kernel(x_ref, w1_ref, b1_ref, w2_ref, b2_ref, o_ref):
    """o = gelu_tanh(x @ w1 + b1) @ w2 + b2, fully fused in VMEM.

    x:(br,C) bf16 | w1:(C,4C) bf16 | b1:(1,4C) f32 | w2:(4C,C) bf16 | b2:(1,C) f32
    """
    h = jnp.dot(x_ref[...], w1_ref[...], preferred_element_type=jnp.float32)
    h = _gelu_tanh(h + b1_ref[...])                       # f32 elementwise epilogue
    y = jnp.dot(h.astype(w2_ref.dtype), w2_ref[...],
                preferred_element_type=jnp.float32)
    o_ref[...] = (y + b2_ref[...]).astype(o_ref.dtype)


# ----------------------------------------------------------------------------- wrapper
def transformer_mlp(x, w1, b1, w2, b2, *, block_rows=256):
    """Equivalent of TransformerMLP.forward: c_proj(gelu_tanh(c_fc(x))).

    x: (..., C) float32.  w1: (C, 4C), b1: (4C,), w2: (4C, C), b2: (C,).
    """
    orig_shape = x.shape
    C = w1.shape[0]
    H = w1.shape[1]                                       # 4*C
    rows = math.prod(orig_shape[:-1]) if len(orig_shape) > 1 else 1
    x2 = x.reshape(rows, C)

    # Row tile: multiple of 8 sublanes, capped so (x_tile + h_tile + out_tile + both
    # weights) stays tiny relative to the 32 MiB scoped / 64 MiB physical (v7x) VMEM.
    br = min(block_rows, _round_up(rows, 8))
    padded = _round_up(rows, br)
    if padded != rows:
        x2 = jnp.pad(x2, ((0, padded - rows), (0, 0)))

    # bf16 MXU operands, f32 accumulation + f32 epilogue.
    x_bf = x2.astype(jnp.bfloat16)
    w1_bf = w1.astype(jnp.bfloat16)
    w2_bf = w2.astype(jnp.bfloat16)
    b1_2d = b1.reshape(1, H).astype(jnp.float32)
    b2_2d = b2.reshape(1, C).astype(jnp.float32)

    grid = (padded // br,)
    out = pl.pallas_call(
        _mlp_kernel,
        out_shape=jax.ShapeDtypeStruct((padded, C), jnp.float32),
        grid=grid,
        in_specs=[
            pl.BlockSpec((br, C), lambda i: (i, 0)),      # activation row tile
            pl.BlockSpec((C, H), lambda i: (0, 0)),       # c_fc weight (resident)
            pl.BlockSpec((1, H), lambda i: (0, 0)),       # c_fc bias
            pl.BlockSpec((H, C), lambda i: (0, 0)),       # c_proj weight (resident)
            pl.BlockSpec((1, C), lambda i: (0, 0)),       # c_proj bias
        ],
        out_specs=pl.BlockSpec((br, C), lambda i: (i, 0)),
        compiler_params=pltpu.CompilerParams(
            dimension_semantics=("parallel",),            # shard row tiles across TCs (v7x)
            vmem_limit_bytes=48 * 1024 * 1024,
        ),
    )(x_bf, w1_bf, b1_2d, w2_bf, b2_2d)

    return out[:rows].reshape(orig_shape)


# ----------------------------------------------------------------------------- main
@dataclasses.dataclass
class Config:
    n_embd: int


if __name__ == "__main__":
    cfg = Config(n_embd=128)
    B, T, C = 2, 8, cfg.n_embd

    key = jax.random.PRNGKey(0)
    kx, k1, k2, k3, k4 = jax.random.split(key, 5)

    x = jax.random.normal(kx, (B, T, C), jnp.float32)

    # PyTorch nn.Linear default init: U(-1/sqrt(fan_in), 1/sqrt(fan_in)).
    lim1 = 1.0 / math.sqrt(C)
    lim2 = 1.0 / math.sqrt(4 * C)
    w1 = jax.random.uniform(k1, (C, 4 * C), jnp.float32, -lim1, lim1)   # c_fc.weight^T
    b1 = jax.random.uniform(k2, (4 * C,), jnp.float32, -lim1, lim1)
    w2 = jax.random.uniform(k3, (4 * C, C), jnp.float32, -lim2, lim2)   # c_proj.weight^T
    b2 = jax.random.uniform(k4, (C,), jnp.float32, -lim2, lim2)

    fwd = jax.jit(transformer_mlp)
    out = fwd(x, w1, b1, w2, b2)
    jax.block_until_ready(out)

    # Pure-JAX f32 reference (kernel uses bf16 MXU operands -> loose tolerance).
    def ref(xv):
        h = xv @ w1 + b1
        h = 0.5 * h * (1.0 + jnp.tanh(math.sqrt(2.0 / math.pi) * (h + 0.044715 * h ** 3)))
        return h @ w2 + b2

    r = ref(x)
    assert out.shape == (B, T, C) and out.dtype == jnp.float32
    max_err = float(jnp.max(jnp.abs(out - r)))
    assert max_err < 5e-2, f"max abs err {max_err}"
    print("KERNEL_OK")
</pallas_src>

<mosaic_0001>
module attributes {stable_mosaic.version = 11 : i64} {
  func.func @_mlp_kernel(%arg0: i32, %arg1: memref<16x128xbf16, #tpu.memory_space<vmem>>, %arg2: memref<128x512xbf16, #tpu.memory_space<vmem>>, %arg3: memref<1x512xf32, #tpu.memory_space<vmem>>, %arg4: memref<512x128xbf16, #tpu.memory_space<vmem>>, %arg5: memref<1x128xf32, #tpu.memory_space<vmem>>, %arg6: memref<16x128xf32, #tpu.memory_space<vmem>>) attributes {dimension_semantics = [#tpu.dimension_semantics<parallel>], iteration_bounds = array<i64: 1>, scalar_prefetch = 0 : i64, scratch_operands = 0 : i64, tpu.core_type = #tpu.core_type<tc>, window_params = [{transform_indices = @transform_0, window_bounds = array<i64: 16, 128>}, {pipeline_mode = #tpu.pipeline_mode<synchronous>, transform_indices = @transform_1, window_bounds = array<i64: 128, 512>}, {pipeline_mode = #tpu.pipeline_mode<synchronous>, transform_indices = @transform_2, window_bounds = array<i64: 1, 512>}, {pipeline_mode = #tpu.pipeline_mode<synchronous>, transform_indices = @transform_3, window_bounds = array<i64: 512, 128>}, {pipeline_mode = #tpu.pipeline_mode<synchronous>, transform_indices = @transform_4, window_bounds = array<i64: 1, 128>}, {transform_indices = @transform_5, window_bounds = array<i64: 16, 128>}]} {
    %c0 = arith.constant 0 : index
    %c0_0 = arith.constant 0 : index
    %0 = vector.load %arg1[%c0, %c0_0] : memref<16x128xbf16, #tpu.memory_space<vmem>>, vector<16x128xbf16>
    %c0_1 = arith.constant 0 : index
    %c0_2 = arith.constant 0 : index
    %1 = vector.load %arg2[%c0_1, %c0_2] : memref<128x512xbf16, #tpu.memory_space<vmem>>, vector<128x512xbf16>
    %cst = arith.constant dense<0.000000e+00> : vector<16x512xf32>
    %2 = tpu.matmul %0, %1, %cst {dimension_numbers = #tpu.dot_dimension_numbers<[1], [0], [0], [1], [0, 0, 1, 1], [], []>} : vector<16x128xbf16>, vector<128x512xbf16>, vector<16x512xf32> -> vector<16x512xf32>
    %c0_3 = arith.constant 0 : index
    %c0_4 = arith.constant 0 : index
    %3 = vector.load %arg3[%c0_3, %c0_4] : memref<1x512xf32, #tpu.memory_space<vmem>>, vector<1x512xf32>
    %4 = vector.broadcast %3 : vector<1x512xf32> to vector<16x512xf32>
    %5 = arith.addf %2, %4 : vector<16x512xf32>
    %cst_5 = arith.constant 5.000000e-01 : f32
    %6 = vector.broadcast %cst_5 : f32 to vector<16x512xf32>
    %7 = arith.mulf %6, %5 : vector<16x512xf32>
    %cst_6 = arith.constant 4.471500e-02 : f32
    %8 = vector.broadcast %cst_6 : f32 to vector<16x512xf32>
    %9 = arith.mulf %8, %5 : vector<16x512xf32>
    %10 = arith.mulf %9, %5 : vector<16x512xf32>
    %11 = arith.mulf %10, %5 : vector<16x512xf32>
    %12 = arith.addf %5, %11 : vector<16x512xf32>
    %cst_7 = arith.constant 0.797884583 : f32
    %13 = vector.broadcast %cst_7 : f32 to vector<16x512xf32>
    %14 = arith.mulf %13, %12 : vector<16x512xf32>
    %15 = math.tanh %14 : vector<16x512xf32>
    %cst_8 = arith.constant 1.000000e+00 : f32
    %16 = vector.broadcast %cst_8 : f32 to vector<16x512xf32>
    %17 = arith.addf %16, %15 : vector<16x512xf32>
    %18 = arith.mulf %7, %17 : vector<16x512xf32>
    %19 = arith.truncf %18 : vector<16x512xf32> to vector<16x512xbf16>
    %c0_9 = arith.constant 0 : index
    %c0_10 = arith.constant 0 : index
    %20 = vector.load %arg4[%c0_9, %c0_10] : memref<512x128xbf16, #tpu.memory_space<vmem>>, vector<512x128xbf16>
    %cst_11 = arith.constant dense<0.000000e+00> : vector<16x128xf32>
    %21 = tpu.matmul %19, %20, %cst_11 {dimension_numbers = #tpu.dot_dimension_numbers<[1], [0], [0], [1], [0, 0, 1, 1], [], []>} : vector<16x512xbf16>, vector<512x128xbf16>, vector<16x128xf32> -> vector<16x128xf32>
    %c0_12 = arith.constant 0 : index
    %c0_13 = arith.constant 0 : index
    %22 = vector.load %arg5[%c0_12, %c0_13] : memref<1x128xf32, #tpu.memory_space<vmem>>, vector<1x128xf32>
    %23 = vector.broadcast %22 : vector<1x128xf32> to vector<16x128xf32>
    %24 = arith.addf %21, %23 : vector<16x128xf32>
    %c0_14 = arith.constant 0 : index
    %c0_15 = arith.constant 0 : index
    %25 = vector.load %arg6[%c0_14, %c0_15] : memref<16x128xf32, #tpu.memory_space<vmem>>, vector<16x128xf32>
    tpu.vector_store %arg6[%c0_14, %c0_15], %24 {strides = array<i32>} : memref<16x128xf32, #tpu.memory_space<vmem>>, vector<16x128xf32>,
    return
  }
  func.func @transform_0(%arg0: i32) -> (i32, i32) {
    %c0_i32 = arith.constant 0 : i32
    %c0_i32_0 = arith.constant 0 : i32
    return %arg0, %c0_i32 : i32, i32
  }
  func.func @transform_1(%arg0: i32) -> (i32, i32) {
    %c0_i32 = arith.constant 0 : i32
    %c0_i32_0 = arith.constant 0 : i32
    %c0_i32_1 = arith.constant 0 : i32
    return %c0_i32, %c0_i32_0 : i32, i32
  }
  func.func @transform_2(%arg0: i32) -> (i32, i32) {
    %c0_i32 = arith.constant 0 : i32
    %c0_i32_0 = arith.constant 0 : i32
    %c0_i32_1 = arith.constant 0 : i32
    return %c0_i32, %c0_i32_0 : i32, i32
  }
  func.func @transform_3(%arg0: i32) -> (i32, i32) {
    %c0_i32 = arith.constant 0 : i32
    %c0_i32_0 = arith.constant 0 : i32
    %c0_i32_1 = arith.constant 0 : i32
    return %c0_i32, %c0_i32_0 : i32, i32
  }
  func.func @transform_4(%arg0: i32) -> (i32, i32) {
    %c0_i32 = arith.constant 0 : i32
    %c0_i32_0 = arith.constant 0 : i32
    %c0_i32_1 = arith.constant 0 : i32
    return %c0_i32, %c0_i32_0 : i32, i32
  }
  func.func @transform_5(%arg0: i32) -> (i32, i32) {
    %c0_i32 = arith.constant 0 : i32
    %c0_i32_0 = arith.constant 0 : i32
    return %arg0, %c0_i32 : i32, i32
  }
}

</mosaic_0001>

<llo_original>
// kernel: transformer_mlp.1
$region0: #{transformer_mlp.1}
  #allocation0 [shape = 'u32[]', space=smem, size = 0x4, offset = 0x4, fixed_abs, tag = 'smem constant byte address 0x4 - core index']
  #allocation1 [shape = 'u32[144,128]{1,0:T(1,128)}', space=vmem, size = 0x12000, scoped, tag = 'internal scratch']
  %s0 = inlined_call_operand.vmem [shape: bf16[16,128], index: 0, kind: input, shape index: {}]
  %s1 = inlined_call_operand.vmem [shape: bf16[128,512], index: 1, kind: input, shape index: {}]
  %s2 = inlined_call_operand.vmem [shape: f32[1,512], index: 2, kind: input, shape index: {}]
  %s3 = inlined_call_operand.vmem [shape: bf16[512,128], index: 3, kind: input, shape index: {}]
  %s4 = inlined_call_operand.vmem [shape: f32[1,128], index: 4, kind: input, shape index: {}]
  %s5 = inlined_call_operand.hbm [shape: f32[16,128], index: 5, kind: output, shape index: {}]
  %s6 = sld [smem:[#allocation0]]
  $region30: #{transformer_mlp.1} parent=0
    _
  %s8 = ssub.s32 1, %s6
  %s9 = scalar_select 0, %s8, %s6
  $region1: #{transformer_mlp.1} parent=0
    #allocation2 [shape = 'u8[8192]{0}', space=vmem, size = 0x2000, scoped, tag = 'output window, operand 0, single buffered']
    #allocation3 [shape = 's32[1]{0}', space=sflag, size = 0x4, scoped, tag = 'scoped memory for transformer_mlp.1']
    %10 = vsyncpa [#allocation3], 0
    // Predicated region
    $region2: #{transformer_mlp.1} parent=1 // pred_check
      _
    $region3: #{transformer_mlp.1} parent=1 // pred_check_branch
      %12 = sbr.rel (0) target = $region5
    $region4: #{transformer_mlp.1} parent=1 // pred_region
      _
    $region5: #{transformer_mlp.1} parent=1 // pred_fallthru
      _
    // Predicated region
    $region6: #{transformer_mlp.1} parent=1 // pred_check
      _
    $region7: #{transformer_mlp.1} parent=1 // pred_check_branch
      %14 = sbr.rel (0) target = $region9
    $region8: #{transformer_mlp.1} parent=1 // pred_region
      _
    $region9: #{transformer_mlp.1} parent=1 // pred_fallthru
      _
    // Predicated region
    $region10: #{transformer_mlp.1} parent=1 // pred_check
      _
    $region11: #{transformer_mlp.1} parent=1 // pred_check_branch
      %16 = sbr.rel (0) target = $region13
    $region12: #{transformer_mlp.1} parent=1 // pred_region
      _
    $region13: #{transformer_mlp.1} parent=1 // pred_fallthru
      _
    // Predicated region
    $region14: #{transformer_mlp.1} parent=1 // pred_check
      _
    $region15: #{transformer_mlp.1} parent=1 // pred_check_branch
      %18 = sbr.rel (0) target = $region17
    $region16: #{transformer_mlp.1} parent=1 // pred_region
      _
    $region17: #{transformer_mlp.1} parent=1 // pred_fallthru
      _
    // Predicated region
    $region18: #{transformer_mlp.1} parent=1 // pred_check
      _
    $region19: #{transformer_mlp.1} parent=1 // pred_check_branch
      %20 = sbr.rel (0) target = $region21
    $region20: #{transformer_mlp.1} parent=1 // pred_region
      _
    $region21: #{transformer_mlp.1} parent=1 // pred_fallthru
      _
    %v22 = vld [vmem:[%s0] sm:$0xf]
    %v23 = vld [vmem:[%s0 + $0x4] sm:$0xf]
    %v24 = vld [vmem:[%s1] sm:$0xff]
    %v25 = vld [vmem:[%s1 + $0x8] sm:$0xff]
    %v26 = vld [vmem:[%s1 + $0x10] sm:$0xff]
    %v27 = vld [vmem:[%s1 + $0x18] sm:$0xff]
    %v28 = vld [vmem:[%s1 + $0x20] sm:$0xff]
    %v29 = vld [vmem:[%s1 + $0x28] sm:$0xff]
    %v30 = vld [vmem:[%s1 + $0x30] sm:$0xff]
    %v31 = vld [vmem:[%s1 + $0x38] sm:$0xff]
    %v32 = vld [vmem:[%s1 + $0x40] sm:$0xff]
    %v33 = vld [vmem:[%s1 + $0x48] sm:$0xff]
    %v34 = vld [vmem:[%s1 + $0x50] sm:$0xff]
    %v35 = vld [vmem:[%s1 + $0x58] sm:$0xff]
    %v36 = vld [vmem:[%s1 + $0x60] sm:$0xff]
    %v37 = vld [vmem:[%s1 + $0x68] sm:$0xff]
    %v38 = vld [vmem:[%s1 + $0x70] sm:$0xff]
    %v39 = vld [vmem:[%s1 + $0x78] sm:$0xff]
    %v40 = vld [vmem:[%s1 + $0x80] sm:$0xff]
    %v41 = vld [vmem:[%s1 + $0x88] sm:$0xff]
    %v42 = vld [vmem:[%s1 + $0x90] sm:$0xff]
    %v43 = vld [vmem:[%s1 + $0x98] sm:$0xff]
    %v44 = vld [vmem:[%s1 + $0xa0] sm:$0xff]
    %v45 = vld [vmem:[%s1 + $0xa8] sm:$0xff]
    %v46 = vld [vmem:[%s1 + $0xb0] sm:$0xff]
    %v47 = vld [vmem:[%s1 + $0xb8] sm:$0xff]
    %v48 = vld [vmem:[%s1 + $0xc0] sm:$0xff]
    %v49 = vld [vmem:[%s1 + $0xc8] sm:$0xff]
    %v50 = vld [vmem:[%s1 + $0xd0] sm:$0xff]
    %v51 = vld [vmem:[%s1 + $0xd8] sm:$0xff]
    %v52 = vld [vmem:[%s1 + $0xe0] sm:$0xff]
    %v53 = vld [vmem:[%s1 + $0xe8] sm:$0xff]
    %v54 = vld [vmem:[%s1 + $0xf0] sm:$0xff]
    %v55 = vld [vmem:[%s1 + $0xf8] sm:$0xff]
    %v56 = vld [vmem:[%s2] sm:$0xf]
    %v58 = vlaneseq
    %v59 = vshrl.u32 %v58, 7
    %v60 = vsub.s32 0, %v59
    %v61 = vrot.slane %v56, %v60
    %v62 = vlaneseq
    %v63 = vshrl.u32 %v62, 7
    %v64 = vsub.s32 1, %v63
    %v65 = vrot.slane %v56, %v64
    %v66 = vlaneseq
    %v67 = vshrl.u32 %v66, 7
    %v68 = vsub.s32 2, %v67
    %v69 = vrot.slane %v56, %v68
    %v70 = vlaneseq
    %v71 = vshrl.u32 %v70, 7
    %v72 = vsub.s32 3, %v71
    %v73 = vrot.slane %v56, %v72
    %v80 = vunpack.c.l.b16 %v22
    %v81 = vunpack.c.l.b16 %v23
    %v82 = vpack.c.b16 %v81, %v80
    %v116 = vunpack.c.l.b16 %v24
    %v117 = vunpack.c.h.b16 %v24
    %v118 = vunpack.c.l.b16 %v25
    %v119 = vunpack.c.h.b16 %v25
    %v120 = vunpack.c.l.b16 %v26
    %v121 = vunpack.c.h.b16 %v26
    %v122 = vunpack.c.l.b16 %v27
    %v123 = vunpack.c.h.b16 %v27
    %v124 = vunpack.c.l.b16 %v28
    %v125 = vunpack.c.h.b16 %v28
    %v126 = vunpack.c.l.b16 %v29
    %v127 = vunpack.c.h.b16 %v29
    %v128 = vunpack.c.l.b16 %v30
    %v129 = vunpack.c.h.b16 %v30
    %v130 = vunpack.c.l.b16 %v31
    %v131 = vunpack.c.h.b16 %v31
    %v132 = vunpack.c.l.b16 %v32
    %v133 = vunpack.c.h.b16 %v32
    %v134 = vunpack.c.l.b16 %v33
    %v135 = vunpack.c.h.b16 %v33
    %v136 = vunpack.c.l.b16 %v34
    %v137 = vunpack.c.h.b16 %v34
    %v138 = vunpack.c.l.b16 %v35
    %v139 = vunpack.c.h.b16 %v35
    %v140 = vunpack.c.l.b16 %v36
    %v141 = vunpack.c.h.b16 %v36
    %v142 = vunpack.c.l.b16 %v37
    %v143 = vunpack.c.h.b16 %v37
    %v144 = vunpack.c.l.b16 %v38
    %v145 = vunpack.c.h.b16 %v38
    %v146 = vunpack.c.l.b16 %v39
    %v147 = vunpack.c.h.b16 %v39
    %v148 = vunpack.c.l.b16 %v40
    %v149 = vunpack.c.h.b16 %v40
    %v150 = vunpack.c.l.b16 %v41
    %v151 = vunpack.c.h.b16 %v41
    %v152 = vunpack.c.l.b16 %v42
    %v153 = vunpack.c.h.b16 %v42
    %v154 = vunpack.c.l.b16 %v43
    %v155 = vunpack.c.h.b16 %v43
    %v156 = vunpack.c.l.b16 %v44
    %v157 = vunpack.c.h.b16 %v44
    %v158 = vunpack.c.l.b16 %v45
    %v159 = vunpack.c.h.b16 %v45
    %v160 = vunpack.c.l.b16 %v46
    %v161 = vunpack.c.h.b16 %v46
    %v162 = vunpack.c.l.b16 %v47
    %v163 = vunpack.c.h.b16 %v47
    %v164 = vunpack.c.l.b16 %v48
    %v165 = vunpack.c.h.b16 %v48
    %v166 = vunpack.c.l.b16 %v49
    %v167 = vunpack.c.h.b16 %v49
    %v168 = vunpack.c.l.b16 %v50
    %v169 = vunpack.c.h.b16 %v50
    %v170 = vunpack.c.l.b16 %v51
    %v171 = vunpack.c.h.b16 %v51
    %v172 = vunpack.c.l.b16 %v52
    %v173 = vunpack.c.h.b16 %v52
    %v174 = vunpack.c.l.b16 %v53
    %v175 = vunpack.c.h.b16 %v53
    %v176 = vunpack.c.l.b16 %v54
    %v177 = vunpack.c.h.b16 %v54
    %v178 = vunpack.c.l.b16 %v55
    %v179 = vunpack.c.h.b16 %v55
    %v180 = vpack.c.b16 %v120, %v116
    %v181 = vpack.c.b16 %v121, %v117
    %v182 = vpack.c.b16 %v122, %v118
    %v183 = vpack.c.b16 %v123, %v119
    %v184 = vpack.c.b16 %v128, %v124
    %v185 = vpack.c.b16 %v129, %v125
    %v186 = vpack.c.b16 %v130, %v126
    %v187 = vpack.c.b16 %v131, %v127
    %v188 = vpack.c.b16 %v136, %v132
    %v189 = vpack.c.b16 %v137, %v133
    %v190 = vpack.c.b16 %v138, %v134
    %v191 = vpack.c.b16 %v139, %v135
    %v192 = vpack.c.b16 %v144, %v140
    %v193 = vpack.c.b16 %v145, %v141
    %v194 = vpack.c.b16 %v146, %v142
    %v195 = vpack.c.b16 %v147, %v143
    %v196 = vpack.c.b16 %v152, %v148
    %v197 = vpack.c.b16 %v153, %v149
    %v198 = vpack.c.b16 %v154, %v150
    %v199 = vpack.c.b16 %v155, %v151
    %v200 = vpack.c.b16 %v160, %v156
    %v201 = vpack.c.b16 %v161, %v157
    %v202 = vpack.c.b16 %v162, %v158
    %v203 = vpack.c.b16 %v163, %v159
    %v204 = vpack.c.b16 %v168, %v164
    %v205 = vpack.c.b16 %v169, %v165
    %v206 = vpack.c.b16 %v170, %v166
    %v207 = vpack.c.b16 %v171, %v167
    %v208 = vpack.c.b16 %v176, %v172
    %v209 = vpack.c.b16 %v177, %v173
    %v210 = vpack.c.b16 %v178, %v174
    %v211 = vpack.c.b16 %v179, %v175
    %244 = vmatprep.subr.bf16.mxu0 %v181
    %245 = vmatpush1.bf16.msra.mxu0 %v180
    %246 = vmatprep.subr.bf16.mxu0 %v185
    %247 = vmatpush1.bf16.msra.mxu0 %v184
    %248 = vmatprep.subr.bf16.mxu0 %v189
    %249 = vmatpush1.bf16.msra.mxu0 %v188
    %250 = vmatprep.subr.bf16.mxu0 %v193
    %251 = vmatpush1.bf16.msra.mxu0 %v192
    %252 = vmatprep.subr.bf16.mxu0 %v197
    %253 = vmatpush1.bf16.msra.mxu0 %v196
    %254 = vmatprep.subr.bf16.mxu0 %v201
    %255 = vmatpush1.bf16.msra.mxu0 %v200
    %256 = vmatprep.subr.bf16.mxu0 %v205
    %257 = vmatpush1.bf16.msra.mxu0 %v204
    %258 = vmatprep.subr.bf16.mxu0 %v209
    %259 = vmatpush1.bf16.msra.mxu0 %v208
    %260 = vmatprep.subr.bf16.mxu0 0
    %261 = vmatpush1.bf16.msra.mxu0 0
    %262 = vmatprep.subr.bf16.mxu0 0
    %263 = vmatpush1.bf16.msra.mxu0 0
    %264 = vmatprep.subr.bf16.mxu0 0
    %265 = vmatpush1.bf16.msra.mxu0 0
    %266 = vmatprep.subr.bf16.mxu0 0
    %267 = vmatpush1.bf16.msra.mxu0 0
    %268 = vmatprep.subr.bf16.mxu0 0
    %269 = vmatpush1.bf16.msra.mxu0 0
    %270 = vmatprep.subr.bf16.mxu0 0
    %271 = vmatpush1.bf16.msra.mxu0 0
    %272 = vmatprep.subr.bf16.mxu0 0
    %273 = vmatpush1.bf16.msra.mxu0 0
    %274 = vmatprep.subr.bf16.mxu0 0
    %275 = vmatpush1.bf16.msra.mxu0 0
    %276 = vmatprep.mubr.bf16.mxu0 0
    %277 = vmatmul.mubr.bf16.gmra.mrb[0].mxu0 %v82
    %v278 = vpop.f32.mrb[0].mxu0
    %v279 = vadd.f32 %v61, %v278
    %v280 = vpop.f32.mrb[0].mxu0
    %v281 = vadd.f32 %v65, %v280
    %v282 = vpop.f32.mrb[0].mxu0
    %v283 = vadd.f32 %v61, %v282
    %v284 = vpop.f32.mrb[0].mxu0
    %v285 = vadd.f32 %v65, %v284
    %286 = vdwg.mxu0
    %287 = vmatprep.subr.bf16.mxu0 %v183
    %288 = vmatpush1.bf16.msra.mxu0 %v182
    %289 = vmatprep.subr.bf16.mxu0 %v187
    %290 = vmatpush1.bf16.msra.mxu0 %v186
    %291 = vmatprep.subr.bf16.mxu0 %v191
    %292 = vmatpush1.bf16.msra.mxu0 %v190
    %293 = vmatprep.subr.bf16.mxu0 %v195
    %294 = vmatpush1.bf16.msra.mxu0 %v194
    %295 = vmatprep.subr.bf16.mxu0 %v199
    %296 = vmatpush1.bf16.msra.mxu0 %v198
    %297 = vmatprep.subr.bf16.mxu0 %v203
    %298 = vmatpush1.bf16.msra.mxu0 %v202
    %299 = vmatprep.subr.bf16.mxu0 %v207
    %300 = vmatpush1.bf16.msra.mxu0 %v206
    %301 = vmatprep.subr.bf16.mxu0 %v211
    %302 = vmatpush1.bf16.msra.mxu0 %v210
    %303 = vmatprep.subr.bf16.mxu0 0
    %304 = vmatpush1.bf16.msra.mxu0 0
    %305 = vmatprep.subr.bf16.mxu0 0
    %306 = vmatpush1.bf16.msra.mxu0 0
    %307 = vmatprep.subr.bf16.mxu0 0
    %308 = vmatpush1.bf16.msra.mxu0 0
    %309 = vmatprep.subr.bf16.mxu0 0
    %310 = vmatpush1.bf16.msra.mxu0 0
    %311 = vmatprep.subr.bf16.mxu0 0
    %312 = vmatpush1.bf16.msra.mxu0 0
    %313 = vmatprep.subr.bf16.mxu0 0
    %314 = vmatpush1.bf16.msra.mxu0 0
    %315 = vmatprep.subr.bf16.mxu0 0
    %316 = vmatpush1.bf16.msra.mxu0 0
    %317 = vmatprep.subr.bf16.mxu0 0
    %318 = vmatpush1.bf16.msra.mxu0 0
    %319 = vmatprep.mubr.bf16.mxu0 0
    %320 = vmatmul.mubr.bf16.gmra.mrb[0].mxu0 %v82
    %v321 = vpop.f32.mrb[0].mxu0
    %v322 = vadd.f32 %v69, %v321
    %v323 = vpop.f32.mrb[0].mxu0
    %v324 = vadd.f32 %v73, %v323
    %v325 = vpop.f32.mrb[0].mxu0
    %v326 = vadd.f32 %v69, %v325
    %v327 = vpop.f32.mrb[0].mxu0
    %v328 = vadd.f32 %v73, %v327
    %329 = vdwg.mxu0
    %v330 = vmul.f32 %v279, 0.5
    %v331 = vmul.f32 %v281, 0.5
    %v332 = vmul.f32 %v322, 0.5
    %v333 = vmul.f32 %v324, 0.5
    %v334 = vmul.f32 %v283, 0.5
    %v335 = vmul.f32 %v285, 0.5
    %v336 = vmul.f32 %v326, 0.5
    %v337 = vmul.f32 %v328, 0.5
    %v338 = vmul.f32 %v279, 0.044715
    %v339 = vmul.f32 %v281, 0.044715
    %v340 = vmul.f32 %v322, 0.044715
    %v341 = vmul.f32 %v324, 0.044715
    %v342 = vmul.f32 %v283, 0.044715
    %v343 = vmul.f32 %v285, 0.044715
    %v344 = vmul.f32 %v326, 0.044715
    %v345 = vmul.f32 %v328, 0.044715
    %v346 = vmul.f32 %v338, %v279
    %v347 = vmul.f32 %v339, %v281
    %v348 = vmul.f32 %v340, %v322
    %v349 = vmul.f32 %v341, %v324
    %v350 = vmul.f32 %v342, %v283
    %v351 = vmul.f32 %v343, %v285
    %v352 = vmul.f32 %v344, %v326
    %v353 = vmul.f32 %v345, %v328
    %v354 = vmul.f32 %v346, %v279
    %v355 = vmul.f32 %v347, %v281
    %v356 = vmul.f32 %v348, %v322
    %v357 = vmul.f32 %v349, %v324
    %v358 = vmul.f32 %v350, %v283
    %v359 = vmul.f32 %v351, %v285
    %v360 = vmul.f32 %v352, %v326
    %v361 = vmul.f32 %v353, %v328
    %v362 = vadd.f32 %v279, %v354
    %v363 = vadd.f32 %v281, %v355
    %v364 = vadd.f32 %v322, %v356
    %v365 = vadd.f32 %v324, %v357
    %v366 = vadd.f32 %v283, %v358
    %v367 = vadd.f32 %v285, %v359
    %v368 = vadd.f32 %v326, %v360
    %v369 = vadd.f32 %v328, %v361
    %v370 = vmul.f32 %v362, 0.7978846
    %v371 = vmul.f32 %v363, 0.7978846
    %v372 = vmul.f32 %v364, 0.7978846
    %v373 = vmul.f32 %v365, 0.7978846
    %v374 = vmul.f32 %v366, 0.7978846
    %v375 = vmul.f32 %v367, 0.7978846
    %v376 = vmul.f32 %v368, 0.7978846
    %v377 = vmul.f32 %v369, 0.7978846
    %v378 = vtanh.pop %v370
    %v379 = vtanh.pop %v371
    %v380 = vtanh.pop %v372
    %v381 = vtanh.pop %v373
    %v382 = vtanh.pop %v374
    %v383 = vtanh.pop %v375
    %v384 = vtanh.pop %v376
    %v385 = vtanh.pop %v377
    %v386 = vadd.f32 %v378, 1.0
    %v387 = vadd.f32 %v379, 1.0
    %v388 = vadd.f32 %v380, 1.0
    %v389 = vadd.f32 %v381, 1.0
    %v390 = vadd.f32 %v382, 1.0
    %v391 = vadd.f32 %v383, 1.0
    %v392 = vadd.f32 %v384, 1.0
    %v393 = vadd.f32 %v385, 1.0
    %v394 = vmul.f32 %v330, %v386
    %v395 = vmul.f32 %v331, %v387
    %v396 = vmul.f32 %v332, %v388
    %v397 = vmul.f32 %v333, %v389
    %v398 = vmul.f32 %v334, %v390
    %v399 = vmul.f32 %v335, %v391
    %v400 = vmul.f32 %v336, %v392
    %v401 = vmul.f32 %v337, %v393
    %v402 = vpack.c.bf16 %v398, %v394
    %v403 = vpack.c.bf16 %v399, %v395
    %v404 = vpack.c.bf16 %v400, %v396
    %v405 = vpack.c.bf16 %v401, %v397
    %v406 = vld [vmem:[%s3] sm:$0xf]
    %v407 = vld [vmem:[%s3 + $0x4] sm:$0xf]
    %v408 = vld [vmem:[%s3 + $0x8] sm:$0xf]
    %v409 = vld [vmem:[%s3 + $0xc] sm:$0xf]
    %v410 = vld [vmem:[%s3 + $0x10] sm:$0xf]
    %v411 = vld [vmem:[%s3 + $0x14] sm:$0xf]
    %v412 = vld [vmem:[%s3 + $0x18] sm:$0xf]
    %v413 = vld [vmem:[%s3 + $0x1c] sm:$0xf]
    %v414 = vld [vmem:[%s3 + $0x20] sm:$0xf]
    %v415 = vld [vmem:[%s3 + $0x24] sm:$0xf]
    %v416 = vld [vmem:[%s3 + $0x28] sm:$0xf]
    %v417 = vld [vmem:[%s3 + $0x2c] sm:$0xf]
    %v418 = vld [vmem:[%s3 + $0x30] sm:$0xf]
    %v419 = vld [vmem:[%s3 + $0x34] sm:$0xf]
    %v420 = vld [vmem:[%s3 + $0x38] sm:$0xf]
    %v421 = vld [vmem:[%s3 + $0x3c] sm:$0xf]
    %v422 = vld [vmem:[%s3 + $0x40] sm:$0xf]
    %v423 = vld [vmem:[%s3 + $0x44] sm:$0xf]
    %v424 = vld [vmem:[%s3 + $0x48] sm:$0xf]
    %v425 = vld [vmem:[%s3 + $0x4c] sm:$0xf]
    %v426 = vld [vmem:[%s3 + $0x50] sm:$0xf]
    %v427 = vld [vmem:[%s3 + $0x54] sm:$0xf]
    %v428 = vld [vmem:[%s3 + $0x58] sm:$0xf]
    %v429 = vld [vmem:[%s3 + $0x5c] sm:$0xf]
    %v430 = vld [vmem:[%s3 + $0x60] sm:$0xf]
    %v431 = vld [vmem:[%s3 + $0x64] sm:$0xf]
    %v432 = vld [vmem:[%s3 + $0x68] sm:$0xf]
    %v433 = vld [vmem:[%s3 + $0x6c] sm:$0xf]
    %v434 = vld [vmem:[%s3 + $0x70] sm:$0xf]
    %v435 = vld [vmem:[%s3 + $0x74] sm:$0xf]
    %v436 = vld [vmem:[%s3 + $0x78] sm:$0xf]
    %v437 = vld [vmem:[%s3 + $0x7c] sm:$0xf]
    %v438 = vld [vmem:[%s3 + $0x80] sm:$0xf]
    %v439 = vld [vmem:[%s3 + $0x84] sm:$0xf]
    %v440 = vld [vmem:[%s3 + $0x88] sm:$0xf]
    %v441 = vld [vmem:[%s3 + $0x8c] sm:$0xf]
    %v442 = vld [vmem:[%s3 + $0x90] sm:$0xf]
    %v443 = vld [vmem:[%s3 + $0x94] sm:$0xf]
    %v444 = vld [vmem:[%s3 + $0x98] sm:$0xf]
    %v445 = vld [vmem:[%s3 + $0x9c] sm:$0xf]
    %v446 = vld [vmem:[%s3 + $0xa0] sm:$0xf]
    %v447 = vld [vmem:[%s3 + $0xa4] sm:$0xf]
    %v448 = vld [vmem:[%s3 + $0xa8] sm:$0xf]
    %v449 = vld [vmem:[%s3 + $0xac] sm:$0xf]
    %v450 = vld [vmem:[%s3 + $0xb0] sm:$0xf]
    %v451 = vld [vmem:[%s3 + $0xb4] sm:$0xf]
    %v452 = vld [vmem:[%s3 + $0xb8] sm:$0xf]
    %v453 = vld [vmem:[%s3 + $0xbc] sm:$0xf]
    %v454 = vld [vmem:[%s3 + $0xc0] sm:$0xf]
    %v455 = vld [vmem:[%s3 + $0xc4] sm:$0xf]
    %v456 = vld [vmem:[%s3 + $0xc8] sm:$0xf]
    %v457 = vld [vmem:[%s3 + $0xcc] sm:$0xf]
    %v458 = vld [vmem:[%s3 + $0xd0] sm:$0xf]
    %v459 = vld [vmem:[%s3 + $0xd4] sm:$0xf]
    %v460 = vld [vmem:[%s3 + $0xd8] sm:$0xf]
    %v461 = vld [vmem:[%s3 + $0xdc] sm:$0xf]
    %v462 = vld [vmem:[%s3 + $0xe0] sm:$0xf]
    %v463 = vld [vmem:[%s3 + $0xe4] sm:$0xf]
    %v464 = vld [vmem:[%s3 + $0xe8] sm:$0xf]
    %v465 = vld [vmem:[%s3 + $0xec] sm:$0xf]
    %v466 = vld [vmem:[%s3 + $0xf0] sm:$0xf]
    %v467 = vld [vmem:[%s3 + $0xf4] sm:$0xf]
    %v468 = vld [vmem:[%s3 + $0xf8] sm:$0xf]
    %v469 = vld [vmem:[%s3 + $0xfc] sm:$0xf]
    %v470 = vld [vmem:[%s4] sm:$0x1]
    %v472 = vlaneseq
    %v473 = vshrl.u32 %v472, 7
    %v474 = vsub.s32 0, %v473
    %v475 = vrot.slane %v470, %v474
    %v541 = vunpack.c.l.b16 %v406
    %v542 = vunpack.c.l.b16 %v407
    %v543 = vunpack.c.l.b16 %v408
    %v544 = vunpack.c.l.b16 %v409
    %v545 = vunpack.c.l.b16 %v410
    %v546 = vunpack.c.l.b16 %v411
    %v547 = vunpack.c.l.b16 %v412
    %v548 = vunpack.c.l.b16 %v413
    %v549 = vunpack.c.l.b16 %v414
    %v550 = vunpack.c.l.b16 %v415
    %v551 = vunpack.c.l.b16 %v416
    %v552 = vunpack.c.l.b16 %v417
    %v553 = vunpack.c.l.b16 %v418
    %v554 = vunpack.c.l.b16 %v419
    %v555 = vunpack.c.l.b16 %v420
    %v556 = vunpack.c.l.b16 %v421
    %v557 = vunpack.c.l.b16 %v422
    %v558 = vunpack.c.l.b16 %v423
    %v559 = vunpack.c.l.b16 %v424
    %v560 = vunpack.c.l.b16 %v425
    %v561 = vunpack.c.l.b16 %v426
    %v562 = vunpack.c.l.b16 %v427
    %v563 = vunpack.c.l.b16 %v428
    %v564 = vunpack.c.l.b16 %v429
    %v565 = vunpack.c.l.b16 %v430
    %v566 = vunpack.c.l.b16 %v431
    %v567 = vunpack.c.l.b16 %v432
    %v568 = vunpack.c.l.b16 %v433
    %v569 = vunpack.c.l.b16 %v434
    %v570 = vunpack.c.l.b16 %v435
    %v571 = vunpack.c.l.b16 %v436
    %v572 = vunpack.c.l.b16 %v437
    %v573 = vunpack.c.l.b16 %v438
    %v574 = vunpack.c.l.b16 %v439
    %v575 = vunpack.c.l.b16 %v440
    %v576 = vunpack.c.l.b16 %v441
    %v577 = vunpack.c.l.b16 %v442
    %v578 = vunpack.c.l.b16 %v443
    %v579 = vunpack.c.l.b16 %v444
    %v580 = vunpack.c.l.b16 %v445
    %v581 = vunpack.c.l.b16 %v446
    %v582 = vunpack.c.l.b16 %v447
    %v583 = vunpack.c.l.b16 %v448
    %v584 = vunpack.c.l.b16 %v449
    %v585 = vunpack.c.l.b16 %v450
    %v586 = vunpack.c.l.b16 %v451
    %v587 = vunpack.c.l.b16 %v452
    %v588 = vunpack.c.l.b16 %v453
    %v589 = vunpack.c.l.b16 %v454
    %v590 = vunpack.c.l.b16 %v455
    %v591 = vunpack.c.l.b16 %v456
    %v592 = vunpack.c.l.b16 %v457
    %v593 = vunpack.c.l.b16 %v458
    %v594 = vunpack.c.l.b16 %v459
    %v595 = vunpack.c.l.b16 %v460
    %v596 = vunpack.c.l.b16 %v461
    %v597 = vunpack.c.l.b16 %v462
    %v598 = vunpack.c.l.b16 %v463
    %v599 = vunpack.c.l.b16 %v464
    %v600 = vunpack.c.l.b16 %v465
    %v601 = vunpack.c.l.b16 %v466
    %v602 = vunpack.c.l.b16 %v467
    %v603 = vunpack.c.l.b16 %v468
    %v604 = vunpack.c.l.b16 %v469
    %v605 = vpack.c.b16 %v542, %v541
    %v606 = vpack.c.b16 %v544, %v543
    %v607 = vpack.c.b16 %v546, %v545
    %v608 = vpack.c.b16 %v548, %v547
    %v609 = vpack.c.b16 %v550, %v549
    %v610 = vpack.c.b16 %v552, %v551
    %v611 = vpack.c.b16 %v554, %v553
    %v612 = vpack.c.b16 %v556, %v555
    %v613 = vpack.c.b16 %v558, %v557
    %v614 = vpack.c.b16 %v560, %v559
    %v615 = vpack.c.b16 %v562, %v561
    %v616 = vpack.c.b16 %v564, %v563
    %v617 = vpack.c.b16 %v566, %v565
    %v618 = vpack.c.b16 %v568, %v567
    %v619 = vpack.c.b16 %v570, %v569
    %v620 = vpack.c.b16 %v572, %v571
    %v621 = vpack.c.b16 %v574, %v573
    %v622 = vpack.c.b16 %v576, %v575
    %v623 = vpack.c.b16 %v578, %v577
    %v624 = vpack.c.b16 %v580, %v579
    %v625 = vpack.c.b16 %v582, %v581
    %v626 = vpack.c.b16 %v584, %v583
    %v627 = vpack.c.b16 %v586, %v585
    %v628 = vpack.c.b16 %v588, %v587
    %v629 = vpack.c.b16 %v590, %v589
    %v630 = vpack.c.b16 %v592, %v591
    %v631 = vpack.c.b16 %v594, %v593
    %v632 = vpack.c.b16 %v596, %v595
    %v633 = vpack.c.b16 %v598, %v597
    %v634 = vpack.c.b16 %v600, %v599
    %v635 = vpack.c.b16 %v602, %v601
    %v636 = vpack.c.b16 %v604, %v603
    %669 = vmatprep.subr.bf16.mxu0 0
    %670 = vmatpush1.bf16.msra.mxu0 %v605
    %671 = vmatprep.subr.bf16.mxu0 0
    %672 = vmatpush1.bf16.msra.mxu0 %v606
    %673 = vmatprep.subr.bf16.mxu0 0
    %674 = vmatpush1.bf16.msra.mxu0 %v607
    %675 = vmatprep.subr.bf16.mxu0 0
    %676 = vmatpush1.bf16.msra.mxu0 %v608
    %677 = vmatprep.subr.bf16.mxu0 0
    %678 = vmatpush1.bf16.msra.mxu0 %v609
    %679 = vmatprep.subr.bf16.mxu0 0
    %680 = vmatpush1.bf16.msra.mxu0 %v610
    %681 = vmatprep.subr.bf16.mxu0 0
    %682 = vmatpush1.bf16.msra.mxu0 %v611
    %683 = vmatprep.subr.bf16.mxu0 0
    %684 = vmatpush1.bf16.msra.mxu0 %v612
    %685 = vmatprep.subr.bf16.mxu0 0
    %686 = vmatpush1.bf16.msra.mxu0 %v613
    %687 = vmatprep.subr.bf16.mxu0 0
    %688 = vmatpush1.bf16.msra.mxu0 %v614
    %689 = vmatprep.subr.bf16.mxu0 0
    %690 = vmatpush1.bf16.msra.mxu0 %v615
    %691 = vmatprep.subr.bf16.mxu0 0
    %692 = vmatpush1.bf16.msra.mxu0 %v616
    %693 = vmatprep.subr.bf16.mxu0 0
    %694 = vmatpush1.bf16.msra.mxu0 %v617
    %695 = vmatprep.subr.bf16.mxu0 0
    %696 = vmatpush1.bf16.msra.mxu0 %v618
    %697 = vmatprep.subr.bf16.mxu0 0
    %698 = vmatpush1.bf16.msra.mxu0 %v619
    %699 = vmatprep.subr.bf16.mxu0 0
    %700 = vmatpush1.bf16.msra.mxu0 %v620
    %701 = vmatprep.mubr.bf16.mxu0 %v403
    %702 = vmatmul.mubr.bf16.gmra.mrb[0].mxu0 %v402
    %v703 = vpop.f32.mrb[0].mxu0
    %v704 = vadd.f32 %v475, %v703
    %v705 = vpop.f32.mrb[0].mxu0
    %v706 = vpop.f32.mrb[0].mxu0
    %v707 = vadd.f32 %v475, %v706
    %v708 = vpop.f32.mrb[0].mxu0
    %709 = vdwg.mxu0
    %710 = vmatprep.subr.bf16.mxu0 0
    %711 = vmatpush1.bf16.msra.mxu0 %v621
    %712 = vmatprep.subr.bf16.mxu0 0
    %713 = vmatpush1.bf16.msra.mxu0 %v622
    %714 = vmatprep.subr.bf16.mxu0 0
    %715 = vmatpush1.bf16.msra.mxu0 %v623
    %716 = vmatprep.subr.bf16.mxu0 0
    %717 = vmatpush1.bf16.msra.mxu0 %v624
    %718 = vmatprep.subr.bf16.mxu0 0
    %719 = vmatpush1.bf16.msra.mxu0 %v625
    %720 = vmatprep.subr.bf16.mxu0 0
    %721 = vmatpush1.bf16.msra.mxu0 %v626
    %722 = vmatprep.subr.bf16.mxu0 0
    %723 = vmatpush1.bf16.msra.mxu0 %v627
    %724 = vmatprep.subr.bf16.mxu0 0
    %725 = vmatpush1.bf16.msra.mxu0 %v628
    %726 = vmatprep.subr.bf16.mxu0 0
    %727 = vmatpush1.bf16.msra.mxu0 %v629
    %728 = vmatprep.subr.bf16.mxu0 0
    %729 = vmatpush1.bf16.msra.mxu0 %v630
    %730 = vmatprep.subr.bf16.mxu0 0
    %731 = vmatpush1.bf16.msra.mxu0 %v631
    %732 = vmatprep.subr.bf16.mxu0 0
    %733 = vmatpush1.bf16.msra.mxu0 %v632
    %734 = vmatprep.subr.bf16.mxu0 0
    %735 = vmatpush1.bf16.msra.mxu0 %v633
    %736 = vmatprep.subr.bf16.mxu0 0
    %737 = vmatpush1.bf16.msra.mxu0 %v634
    %738 = vmatprep.subr.bf16.mxu0 0
    %739 = vmatpush1.bf16.msra.mxu0 %v635
    %740 = vmatprep.subr.bf16.mxu0 0
    %741 = vmatpush1.bf16.msra.mxu0 %v636
    %742 = vmatprep.mubr.bf16.mxu0 %v405
    %743 = vmatmul.mubr.bf16.gmra.mrb[0].mxu0 %v404
    %v744 = vpop.f32.mrb[0].mxu0
    %v745 = vadd.f32 %v704, %v744
    %v746 = vpop.f32.mrb[0].mxu0
    %v747 = vpop.f32.mrb[0].mxu0
    %v748 = vadd.f32 %v707, %v747
    %v749 = vpop.f32.mrb[0].mxu0
    %750 = vdwg.mxu0
    %751 = vst [vmem:[#allocation2] sm:$0xff] %v745
    %752 = vst [vmem:[#allocation2 + $0x8] sm:$0xff] %v748
    // Predicated region
    $region22: #{transformer_mlp.1} parent=1 // pred_check
      _
    $region23: #{transformer_mlp.1} parent=1 // pred_check_branch
      %754 = sbr.rel (0) target = $region25
    $region24: #{transformer_mlp.1} parent=1 // pred_region
      %s756 = ssub.s32 256, 256
      %757 = vsyncadd [#allocation3], %s756
      %s758 = sshll.u32 [#allocation2], 4
      %s759 = int_to_ptr.vmem [resolvable:$true] %s758
      %764 = dma.vmem_to_hbm [thread:$0]  %s759, 256, %s5, [#allocation3], 128, 128, 8
    $region25: #{transformer_mlp.1} parent=1 // pred_fallthru
      _
    // Predicated region
    $region26: #{transformer_mlp.1} parent=1 // pred_check
      _
    $region27: #{transformer_mlp.1} parent=1 // pred_check_branch
      %766 = sbr.rel (0) target = $region29
    $region28: #{transformer_mlp.1} parent=1 // pred_region
      %767 = dma.done [#allocation3], 256
    $region29: #{transformer_mlp.1} parent=1 // pred_fallthru
      _
    %768 = vsyncpa [#allocation3], 1

</llo_original>
